<compile_context>
chip_gen: v5e
topology: v5e:2x2
jax: 0.10.0
libtpu: 0.0.40
codegen_flags: <defaults>
</compile_context>

<pallas_src>
import math
import jax
import jax.numpy as jnp
import numpy as np
from jax.experimental import pallas as pl
from jax.experimental.pallas import tpu as pltpu

HIDDEN = 256


def _round_up(x, m):
    return ((x + m - 1) // m) * m


def _cdiv(a, b):
    return -(-a // b)


# --------------------------------------------------------------------------
# Kernel
# --------------------------------------------------------------------------
def actor_fwd_kernel(x_ref, w1_ref, b1_ref, w2_ref, b2_ref, w3_ref, b3_ref,
                     out_ref):
    """Fused 3-layer MLP + tanh on one batch tile.

    x_ref:  [TM, S]      f32  (unpadded feature dim; S == full array dim)
    w1_ref: [S, 256]     bf16, b1_ref: [1, 256]   f32
    w2_ref: [256, 256]   bf16, b2_ref: [1, 256]   f32
    w3_ref: [256, A_pad] bf16 (mean half, zero-padded), b3_ref: [1, A_pad] f32
    out_ref:[TM, A_pad]  bf16
    """
    x = x_ref[...].astype(jnp.bfloat16)

    h1 = jnp.dot(x, w1_ref[...], preferred_element_type=jnp.float32) + b1_ref[...]
    h1 = jnp.maximum(h1, 0.0).astype(jnp.bfloat16)

    h2 = jnp.dot(h1, w2_ref[...], preferred_element_type=jnp.float32) + b2_ref[...]
    h2 = jnp.maximum(h2, 0.0).astype(jnp.bfloat16)

    out = jnp.dot(h2, w3_ref[...], preferred_element_type=jnp.float32) + b3_ref[...]

    # Padded action columns are exactly zero (zero weights + zero bias) -> tanh(0)=0.
    out_ref[...] = jnp.tanh(out).astype(out_ref.dtype)


# --------------------------------------------------------------------------
# One-time parameter preparation (hoisted out of the hot path)
# --------------------------------------------------------------------------
def prepare_actor_params(params):
    """Cast/pack weights once; call outside the training/inference loop."""
    w1, b1, w2, b2, w3, b3 = params
    S, H = w1.shape
    A = w3.shape[1] // 2
    A_pad = _round_up(max(A, 1), 128)

    w1p = w1.astype(jnp.bfloat16)                       # [S, 256] (no row padding)
    b1p = b1.reshape(1, H).astype(jnp.float32)
    w2p = w2.astype(jnp.bfloat16)
    b2p = b2.reshape(1, H).astype(jnp.float32)
    # Only the "mean" half of the output layer is used by forward().
    w3m = jnp.zeros((H, A_pad), jnp.float32).at[:, :A].set(w3[:, :A]).astype(
        jnp.bfloat16)
    b3m = jnp.zeros((1, A_pad), jnp.float32).at[:, :A].set(
        b3.reshape(1, -1)[:, :A])
    return (w1p, b1p, w2p, b2p, w3m, b3m, A)


# --------------------------------------------------------------------------
# Forward wrapper
# --------------------------------------------------------------------------
def actor_forward(states, prepared, *, max_tile=2048):
    """states: [B, state_dim] f32 -> actions [B, action_dim] f32."""
    w1p, b1p, w2p, b2p, w3m, b3m, A = prepared
    B, S = states.shape
    H = w1p.shape[1]
    A_pad = w3m.shape[1]

    # Balanced batch tiling; even >=2 tiles for large B (v7x megacore).
    n_tiles = max(1, _cdiv(B, max_tile))
    if B > 512:
        n_tiles = max(n_tiles, 2)
        if n_tiles % 2:
            n_tiles += 1
    TM = _round_up(_cdiv(B, n_tiles), 16)   # 16: safe sublane tile for bf16 out
    B_pad = TM * n_tiles

    x = states.astype(jnp.float32)
    if B_pad != B:
        x = jnp.zeros((B_pad, S), jnp.float32).at[:B].set(x)

    resident = lambda i: (0, 0)  # weights/biases stay resident across the grid

    flops = 2 * B_pad * (S * H + H * H + H * A_pad)
    bytes_accessed = (B_pad * S * 4                       # states
                      + (w1p.size + w2p.size + w3m.size) * 2
                      + (b1p.size + b2p.size) * 4 + b3m.size * 4
                      + B_pad * A_pad * 2)                # bf16 output

    out = pl.pallas_call(
        actor_fwd_kernel,
        out_shape=jax.ShapeDtypeStruct((B_pad, A_pad), jnp.bfloat16),
        grid=(n_tiles,),
        in_specs=[
            pl.BlockSpec((TM, S), lambda i: (i, 0)),   # states tile (lane dim = S)
            pl.BlockSpec((S, H), resident),            # w1
            pl.BlockSpec((1, H), resident),            # b1
            pl.BlockSpec((H, H), resident),            # w2
            pl.BlockSpec((1, H), resident),            # b2
            pl.BlockSpec((H, A_pad), resident),        # w3 (mean half)
            pl.BlockSpec((1, A_pad), resident),        # b3 (mean half)
        ],
        out_specs=pl.BlockSpec((TM, A_pad), lambda i: (i, 0)),
        compiler_params=pltpu.CompilerParams(
            dimension_semantics=("parallel",),
            vmem_limit_bytes=32 * 1024 * 1024),
        cost_estimate=pl.CostEstimate(
            flops=flops,
            transcendentals=B_pad * A_pad,
            bytes_accessed=bytes_accessed),
    )(x, w1p, b1p, w2p, b2p, w3m, b3m)

    return out[:B, :A].astype(jnp.float32)


# --------------------------------------------------------------------------
# Parameter init (torch.nn.Linear-style), pure-JAX reference, test
# --------------------------------------------------------------------------
def init_linear_params(key, fan_in, fan_out):
    """W is [fan_in, fan_out] (transposed vs torch), b is [1, fan_out]."""
    kw, kb = jax.random.split(key)
    bound = 1.0 / math.sqrt(fan_in)
    w = jax.random.uniform(kw, (fan_in, fan_out), jnp.float32, -bound, bound)
    b = jax.random.uniform(kb, (1, fan_out), jnp.float32, -bound, bound)
    return w, b


def make_actor_params(key, state_dim, action_dim):
    k1, k2, k3 = jax.random.split(key, 3)
    w1, b1 = init_linear_params(k1, state_dim, HIDDEN)
    w2, b2 = init_linear_params(k2, HIDDEN, HIDDEN)
    w3, b3 = init_linear_params(k3, HIDDEN, 2 * action_dim)
    return (w1, b1, w2, b2, w3, b3)


def actor_forward_ref(states, params):
    """Pure-JAX reference with the same bf16-weight / f32-accum numerics."""
    w1, b1, w2, b2, w3, b3 = params
    A = w3.shape[1] // 2
    xb = states.astype(jnp.bfloat16)
    h1 = jnp.maximum(
        jnp.dot(xb, w1.astype(jnp.bfloat16),
                preferred_element_type=jnp.float32) + b1, 0.0)
    h2 = jnp.maximum(
        jnp.dot(h1.astype(jnp.bfloat16), w2.astype(jnp.bfloat16),
                preferred_element_type=jnp.float32) + b2, 0.0)
    out = jnp.dot(h2.astype(jnp.bfloat16), w3[:, :A].astype(jnp.bfloat16),
                  preferred_element_type=jnp.float32) + b3[:, :A]
    return jnp.tanh(out)


if __name__ == "__main__":
    key = jax.random.PRNGKey(0)
    k_params, k_states = jax.random.split(key)

    # Small shapes consistent with the module: state_shape=(16,), action_shape=(4,)
    batch, state_dim, action_dim = 8, 16, 4

    params = make_actor_params(k_params, state_dim, action_dim)
    prepared = prepare_actor_params(params)   # one-time weight prep
    states = jax.random.normal(k_states, (batch, state_dim), jnp.float32)

    actions = jax.block_until_ready(actor_forward(states, prepared))

    expected = jax.block_until_ready(actor_forward_ref(states, params))
    # bf16 output store + bf16 MXU weights -> compare with bf16-level tolerance.
    np.testing.assert_allclose(np.asarray(actions), np.asarray(expected),
                               rtol=1e-2, atol=1e-2)
    assert actions.shape == (batch, action_dim)

    # TODO(synk): Actor_network.sample (reparameterize / log_pi) is stochastic
    # and not part of forward(); only forward() is implemented here.
    print("KERNEL_OK")
</pallas_src>

<mosaic_0001>
module attributes {stable_mosaic.version = 11 : i64} {
  func.func @actor_fwd_kernel(%arg0: i32, %arg1: memref<16x16xf32, #tpu.memory_space<vmem>>, %arg2: memref<16x256xbf16, #tpu.memory_space<vmem>>, %arg3: memref<1x256xf32, #tpu.memory_space<vmem>>, %arg4: memref<256x256xbf16, #tpu.memory_space<vmem>>, %arg5: memref<1x256xf32, #tpu.memory_space<vmem>>, %arg6: memref<256x128xbf16, #tpu.memory_space<vmem>>, %arg7: memref<1x128xf32, #tpu.memory_space<vmem>>, %arg8: memref<16x128xbf16, #tpu.memory_space<vmem>>) attributes {dimension_semantics = [#tpu.dimension_semantics<parallel>], iteration_bounds = array<i64: 1>, scalar_prefetch = 0 : i64, scratch_operands = 0 : i64, tpu.core_type = #tpu.core_type<tc>, window_params = [{transform_indices = @transform_0, window_bounds = array<i64: 16, 16>}, {pipeline_mode = #tpu.pipeline_mode<synchronous>, transform_indices = @transform_1, window_bounds = array<i64: 16, 256>}, {pipeline_mode = #tpu.pipeline_mode<synchronous>, transform_indices = @transform_2, window_bounds = array<i64: 1, 256>}, {pipeline_mode = #tpu.pipeline_mode<synchronous>, transform_indices = @transform_3, window_bounds = array<i64: 256, 256>}, {pipeline_mode = #tpu.pipeline_mode<synchronous>, transform_indices = @transform_4, window_bounds = array<i64: 1, 256>}, {pipeline_mode = #tpu.pipeline_mode<synchronous>, transform_indices = @transform_5, window_bounds = array<i64: 256, 128>}, {pipeline_mode = #tpu.pipeline_mode<synchronous>, transform_indices = @transform_6, window_bounds = array<i64: 1, 128>}, {transform_indices = @transform_7, window_bounds = array<i64: 16, 128>}]} {
    %c0 = arith.constant 0 : index
    %c0_0 = arith.constant 0 : index
    %0 = vector.load %arg1[%c0, %c0_0] : memref<16x16xf32, #tpu.memory_space<vmem>>, vector<16x16xf32>
    %1 = arith.truncf %0 : vector<16x16xf32> to vector<16x16xbf16>
    %c0_1 = arith.constant 0 : index
    %c0_2 = arith.constant 0 : index
    %2 = vector.load %arg2[%c0_1, %c0_2] : memref<16x256xbf16, #tpu.memory_space<vmem>>, vector<16x256xbf16>
    %cst = arith.constant dense<0.000000e+00> : vector<16x256xf32>
    %3 = tpu.matmul %1, %2, %cst {dimension_numbers = #tpu.dot_dimension_numbers<[1], [0], [0], [1], [0, 0, 1, 1], [], []>} : vector<16x16xbf16>, vector<16x256xbf16>, vector<16x256xf32> -> vector<16x256xf32>
    %c0_3 = arith.constant 0 : index
    %c0_4 = arith.constant 0 : index
    %4 = vector.load %arg3[%c0_3, %c0_4] : memref<1x256xf32, #tpu.memory_space<vmem>>, vector<1x256xf32>
    %5 = vector.broadcast %4 : vector<1x256xf32> to vector<16x256xf32>
    %6 = arith.addf %3, %5 : vector<16x256xf32>
    %cst_5 = arith.constant 0.000000e+00 : f32
    %7 = vector.broadcast %cst_5 : f32 to vector<16x256xf32>
    %8 = arith.maximumf %6, %7 : vector<16x256xf32>
    %9 = arith.truncf %8 : vector<16x256xf32> to vector<16x256xbf16>
    %c0_6 = arith.constant 0 : index
    %c0_7 = arith.constant 0 : index
    %10 = vector.load %arg4[%c0_6, %c0_7] : memref<256x256xbf16, #tpu.memory_space<vmem>>, vector<256x256xbf16>
    %cst_8 = arith.constant dense<0.000000e+00> : vector<16x256xf32>
    %11 = tpu.matmul %9, %10, %cst_8 {dimension_numbers = #tpu.dot_dimension_numbers<[1], [0], [0], [1], [0, 0, 1, 1], [], []>} : vector<16x256xbf16>, vector<256x256xbf16>, vector<16x256xf32> -> vector<16x256xf32>
    %c0_9 = arith.constant 0 : index
    %c0_10 = arith.constant 0 : index
    %12 = vector.load %arg5[%c0_9, %c0_10] : memref<1x256xf32, #tpu.memory_space<vmem>>, vector<1x256xf32>
    %13 = vector.broadcast %12 : vector<1x256xf32> to vector<16x256xf32>
    %14 = arith.addf %11, %13 : vector<16x256xf32>
    %cst_11 = arith.constant 0.000000e+00 : f32
    %15 = vector.broadcast %cst_11 : f32 to vector<16x256xf32>
    %16 = arith.maximumf %14, %15 : vector<16x256xf32>
    %17 = arith.truncf %16 : vector<16x256xf32> to vector<16x256xbf16>
    %c0_12 = arith.constant 0 : index
    %c0_13 = arith.constant 0 : index
    %18 = vector.load %arg6[%c0_12, %c0_13] : memref<256x128xbf16, #tpu.memory_space<vmem>>, vector<256x128xbf16>
    %cst_14 = arith.constant dense<0.000000e+00> : vector<16x128xf32>
    %19 = tpu.matmul %17, %18, %cst_14 {dimension_numbers = #tpu.dot_dimension_numbers<[1], [0], [0], [1], [0, 0, 1, 1], [], []>} : vector<16x256xbf16>, vector<256x128xbf16>, vector<16x128xf32> -> vector<16x128xf32>
    %c0_15 = arith.constant 0 : index
    %c0_16 = arith.constant 0 : index
    %20 = vector.load %arg7[%c0_15, %c0_16] : memref<1x128xf32, #tpu.memory_space<vmem>>, vector<1x128xf32>
    %21 = vector.broadcast %20 : vector<1x128xf32> to vector<16x128xf32>
    %22 = arith.addf %19, %21 : vector<16x128xf32>
    %23 = math.tanh %22 : vector<16x128xf32>
    %24 = arith.truncf %23 : vector<16x128xf32> to vector<16x128xbf16>
    %c0_17 = arith.constant 0 : index
    %c0_18 = arith.constant 0 : index
    %25 = vector.load %arg8[%c0_17, %c0_18] : memref<16x128xbf16, #tpu.memory_space<vmem>>, vector<16x128xbf16>
    tpu.vector_store %arg8[%c0_17, %c0_18], %24 {strides = array<i32>} : memref<16x128xbf16, #tpu.memory_space<vmem>>, vector<16x128xbf16>,
    return
  }
  func.func @transform_0(%arg0: i32) -> (i32, i32) {
    %c0_i32 = arith.constant 0 : i32
    %c0_i32_0 = arith.constant 0 : i32
    return %arg0, %c0_i32 : i32, i32
  }
  func.func @transform_1(%arg0: i32) -> (i32, i32) {
    %c0_i32 = arith.constant 0 : i32
    %c0_i32_0 = arith.constant 0 : i32
    %c0_i32_1 = arith.constant 0 : i32
    return %c0_i32, %c0_i32_0 : i32, i32
  }
  func.func @transform_2(%arg0: i32) -> (i32, i32) {
    %c0_i32 = arith.constant 0 : i32
    %c0_i32_0 = arith.constant 0 : i32
    %c0_i32_1 = arith.constant 0 : i32
    return %c0_i32, %c0_i32_0 : i32, i32
  }
  func.func @transform_3(%arg0: i32) -> (i32, i32) {
    %c0_i32 = arith.constant 0 : i32
    %c0_i32_0 = arith.constant 0 : i32
    %c0_i32_1 = arith.constant 0 : i32
    return %c0_i32, %c0_i32_0 : i32, i32
  }
  func.func @transform_4(%arg0: i32) -> (i32, i32) {
    %c0_i32 = arith.constant 0 : i32
    %c0_i32_0 = arith.constant 0 : i32
    %c0_i32_1 = arith.constant 0 : i32
    return %c0_i32, %c0_i32_0 : i32, i32
  }
  func.func @transform_5(%arg0: i32) -> (i32, i32) {
    %c0_i32 = arith.constant 0 : i32
    %c0_i32_0 = arith.constant 0 : i32
    %c0_i32_1 = arith.constant 0 : i32
    return %c0_i32, %c0_i32_0 : i32, i32
  }
  func.func @transform_6(%arg0: i32) -> (i32, i32) {
    %c0_i32 = arith.constant 0 : i32
    %c0_i32_0 = arith.constant 0 : i32
    %c0_i32_1 = arith.constant 0 : i32
    return %c0_i32, %c0_i32_0 : i32, i32
  }
  func.func @transform_7(%arg0: i32) -> (i32, i32) {
    %c0_i32 = arith.constant 0 : i32
    %c0_i32_0 = arith.constant 0 : i32
    return %arg0, %c0_i32 : i32, i32
  }
}

</mosaic_0001>

<llo_original>
// kernel: tpu_custom_call.1
$region0: #{tpu_custom_call.1}
  #allocation0 [shape = 'u32[]', space=smem, size = 0x4, offset = 0x4, fixed_abs, tag = 'smem constant byte address 0x4 - core index']
  #allocation1 [shape = 'u32[72,128]{1,0:T(1,128)}', space=vmem, size = 0x9000, scoped, tag = 'internal scratch']
  %s0 = inlined_call_operand.hbm [shape: f32[16,16], index: 0, kind: input, shape index: {}]
  %s1 = inlined_call_operand.hbm [shape: bf16[16,256], index: 1, kind: input, shape index: {}]
  %s2 = inlined_call_operand.hbm [shape: f32[1,256], index: 2, kind: input, shape index: {}]
  %s3 = inlined_call_operand.hbm [shape: bf16[256,256], index: 3, kind: input, shape index: {}]
  %s4 = inlined_call_operand.vmem [shape: f32[1,256], index: 4, kind: input, shape index: {}]
  %s5 = inlined_call_operand.hbm [shape: bf16[256,128], index: 5, kind: input, shape index: {}]
  %s6 = inlined_call_operand.vmem [shape: f32[1,128], index: 6, kind: input, shape index: {}]
  %s7 = inlined_call_operand.hbm [shape: bf16[16,128], index: 7, kind: output, shape index: {}]
  %s8 = sld [smem:[#allocation0]]
  $region58: #{tpu_custom_call.1} parent=0
    _
  %s10 = ssub.s32 1, %s8
  %s11 = scalar_select 0, %s10, %s8
  $region1: #{tpu_custom_call.1} parent=0
    #allocation2 [shape = 'u8[8192]{0}', space=vmem, size = 0x2000, scoped, tag = 'input window, operand 0, single buffered']
    #allocation3 [shape = 's32[1]{0}', space=sflag, size = 0x4, scoped, tag = 'scoped memory for tpu_custom_call.1']
    #allocation4 [shape = 's32[1]{0}', space=sflag, size = 0x4, scoped, tag = 'scoped memory for tpu_custom_call.1']
    #allocation5 [shape = 'u8[8192]{0}', space=vmem, size = 0x2000, scoped, tag = 'input window, operand 1, single buffered']
    #allocation6 [shape = 's32[1]{0}', space=sflag, size = 0x4, scoped, tag = 'scoped memory for tpu_custom_call.1']
    #allocation7 [shape = 'u8[1024]{0}', space=vmem, size = 0x400, scoped, tag = 'input window, operand 2, single buffered']
    #allocation8 [shape = 'u8[131072]{0}', space=vmem, size = 0x20000, scoped, tag = 'input window, operand 3, single buffered']
    #allocation9 [shape = 's32[1]{0}', space=sflag, size = 0x4, scoped, tag = 'scoped memory for tpu_custom_call.1']
    #allocation10 [shape = 'u8[65536]{0}', space=vmem, size = 0x10000, scoped, tag = 'input window, operand 5, single buffered']
    #allocation11 [shape = 'u8[4096]{0}', space=vmem, size = 0x1000, scoped, tag = 'output window, operand 0, single buffered']
    %12 = vsyncpa [#allocation3], 0
    %13 = vsyncpa [#allocation6], 0
    %14 = vsyncpa [#allocation9], 0
    %15 = vsyncpa [#allocation4], 0
    // Predicated region
    $region2: #{tpu_custom_call.1} parent=1 // pred_check
      _
    $region3: #{tpu_custom_call.1} parent=1 // pred_check_branch
      %17 = sbr.rel (0) target = $region5
    $region4: #{tpu_custom_call.1} parent=1 // pred_region
      %19 = vsyncadd [#allocation3], 0
      %s20 = sshll.u32 %s0, 4
      %s21 = int_to_ptr.hbm [resolvable:$true] %s20
      %s22 = sshll.u32 [#allocation2], 4
      %s23 = int_to_ptr.vmem [resolvable:$true] %s22
      %28 = dma.hbm_to_vmem [thread:$0]  %s21, 256, %s23, [#allocation3], 128, 128, 8
    $region5: #{tpu_custom_call.1} parent=1 // pred_fallthru
      _
    // Predicated region
    $region6: #{tpu_custom_call.1} parent=1 // pred_check
      _
    $region7: #{tpu_custom_call.1} parent=1 // pred_check_branch
      %30 = sbr.rel (0) target = $region9
    $region8: #{tpu_custom_call.1} parent=1 // pred_region
      %32 = vsyncadd [#allocation6], 0
      %s33 = sshll.u32 %s1, 4
      %s34 = int_to_ptr.hbm [resolvable:$true] %s33
      %s35 = sshll.u32 [#allocation5], 4
      %s36 = int_to_ptr.vmem [resolvable:$true] %s35
      %41 = dma.hbm_to_vmem [thread:$0]  %s34, 256, %s36, [#allocation6], 128, 128, 8
    $region9: #{tpu_custom_call.1} parent=1 // pred_fallthru
      _
    // Predicated region
    $region10: #{tpu_custom_call.1} parent=1 // pred_check
      _
    $region11: #{tpu_custom_call.1} parent=1 // pred_check_branch
      %43 = sbr.rel (0) target = $region13
    $region12: #{tpu_custom_call.1} parent=1 // pred_region
      %45 = vsyncadd [#allocation6], 0
      %s47 = sshll.u32 %s2, 4
      %s48 = int_to_ptr.hbm [resolvable:$true] %s47
      %s49 = sshll.u32 [#allocation7], 4
      %s50 = int_to_ptr.vmem [resolvable:$true] %s49
      %52 = dma.hbm_to_vmem [thread:$0]  %s48, 32, %s50, [#allocation6]
    $region13: #{tpu_custom_call.1} parent=1 // pred_fallthru
      _
    // Predicated region
    $region14: #{tpu_custom_call.1} parent=1 // pred_check
      _
    $region15: #{tpu_custom_call.1} parent=1 // pred_check_branch
      %54 = sbr.rel (0) target = $region17
    $region16: #{tpu_custom_call.1} parent=1 // pred_region
      %56 = vsyncadd [#allocation9], 0
      %s57 = sshll.u32 %s3, 4
      %s58 = int_to_ptr.hbm [resolvable:$true] %s57
      %s59 = sshll.u32 [#allocation8], 4
      %s60 = int_to_ptr.vmem [resolvable:$true] %s59
      %65 = dma.hbm_to_vmem [thread:$0]  %s58, 4096, %s60, [#allocation9], 128, 128, 8
    $region17: #{tpu_custom_call.1} parent=1 // pred_fallthru
      _
    // Predicated region
    $region18: #{tpu_custom_call.1} parent=1 // pred_check
      _
    $region19: #{tpu_custom_call.1} parent=1 // pred_check_branch
      %67 = sbr.rel (0) target = $region21
    $region20: #{tpu_custom_call.1} parent=1 // pred_region
      _
    $region21: #{tpu_custom_call.1} parent=1 // pred_fallthru
      _
    // Predicated region
    $region22: #{tpu_custom_call.1} parent=1 // pred_check
      _
    $region23: #{tpu_custom_call.1} parent=1 // pred_check_branch
      %69 = sbr.rel (0) target = $region25
    $region24: #{tpu_custom_call.1} parent=1 // pred_region
      %71 = vsyncadd [#allocation9], 0
      %s72 = sshll.u32 %s5, 4
      %s73 = int_to_ptr.hbm [resolvable:$true] %s72
      %s74 = sshll.u32 [#allocation10], 4
      %s75 = int_to_ptr.vmem [resolvable:$true] %s74
      %80 = dma.hbm_to_vmem [thread:$0]  %s73, 2048, %s75, [#allocation9], 64, 64, 4
    $region25: #{tpu_custom_call.1} parent=1 // pred_fallthru
      _
    // Predicated region
    $region26: #{tpu_custom_call.1} parent=1 // pred_check
      _
    $region27: #{tpu_custom_call.1} parent=1 // pred_check_branch
      %82 = sbr.rel (0) target = $region29
    $region28: #{tpu_custom_call.1} parent=1 // pred_region
      _
    $region29: #{tpu_custom_call.1} parent=1 // pred_fallthru
      _
    // Predicated region
    $region30: #{tpu_custom_call.1} parent=1 // pred_check
      _
    $region31: #{tpu_custom_call.1} parent=1 // pred_check_branch
      %84 = sbr.rel (0) target = $region33
    $region32: #{tpu_custom_call.1} parent=1 // pred_region
      %86 = dma.done [#allocation3], 256
    $region33: #{tpu_custom_call.1} parent=1 // pred_fallthru
      _
    // Predicated region
    $region34: #{tpu_custom_call.1} parent=1 // pred_check
      _
    $region35: #{tpu_custom_call.1} parent=1 // pred_check_branch
      %88 = sbr.rel (0) target = $region37
    $region36: #{tpu_custom_call.1} parent=1 // pred_region
      %90 = dma.done [#allocation6], 256
    $region37: #{tpu_custom_call.1} parent=1 // pred_fallthru
      _
    // Predicated region
    $region38: #{tpu_custom_call.1} parent=1 // pred_check
      _
    $region39: #{tpu_custom_call.1} parent=1 // pred_check_branch
      %92 = sbr.rel (0) target = $region41
    $region40: #{tpu_custom_call.1} parent=1 // pred_region
      %94 = dma.done [#allocation6], 32
    $region41: #{tpu_custom_call.1} parent=1 // pred_fallthru
      _
    // Predicated region
    $region42: #{tpu_custom_call.1} parent=1 // pred_check
      _
    $region43: #{tpu_custom_call.1} parent=1 // pred_check_branch
      %96 = sbr.rel (0) target = $region45
    $region44: #{tpu_custom_call.1} parent=1 // pred_region
      %98 = dma.done [#allocation9], 4096
    $region45: #{tpu_custom_call.1} parent=1 // pred_fallthru
      _
    // Predicated region
    $region46: #{tpu_custom_call.1} parent=1 // pred_check
      _
    $region47: #{tpu_custom_call.1} parent=1 // pred_check_branch
      %100 = sbr.rel (0) target = $region49
    $region48: #{tpu_custom_call.1} parent=1 // pred_region
      %102 = dma.done [#allocation9], 2048
    $region49: #{tpu_custom_call.1} parent=1 // pred_fallthru
      _
    %v104 = vld [vmem:[#allocation2] sm:$0xff]
    %v105 = vld [vmem:[#allocation2 + $0x8] sm:$0xff]
    %v106 = vpack.c.bf16 %v105, %v104
    %v107 = vld [vmem:[#allocation5] sm:$0xff]
    %v108 = vld [vmem:[#allocation5 + $0x8] sm:$0xff]
    %v109 = vld [vmem:[#allocation7] sm:$0x3]
    %v111 = vperm.slane %v109, 0
    %v112 = vperm.slane %v109, 1
    %v117 = vunpack.c.l.b16 %v107
    %v118 = vunpack.c.h.b16 %v107
    %v119 = vunpack.c.l.b16 %v108
    %v120 = vunpack.c.h.b16 %v108
    %v121 = vpack.c.b16 %v119, %v117
    %v122 = vpack.c.b16 %v120, %v118
    %vm125 = vcmask 130048
    %v127 = vsel %vm125, %v106, 0
    %129 = vmatpush.bf16.msra.mxu0 0
    %130 = vmatpush.bf16.msra.mxu0 0
    %131 = vmatpush.bf16.msra.mxu0 0
    %132 = vmatpush.bf16.msra.mxu0 0
    %133 = vmatpush.bf16.msra.mxu0 0
    %134 = vmatpush.bf16.msra.mxu0 0
    %135 = vmatpush.bf16.msra.mxu0 0
    %136 = vmatpush.bf16.msra.mxu0 %v121
    %137 = vmatmul.bf16.gmra.mxu0 %v127
    %v138 = vpop.f32.mrf.mxu0
    %v139 = vadd.f32 %v111, %v138
    %v140 = vpop.f32.mrf.mxu0
    %v141 = vadd.f32 %v111, %v140
    %142 = vdwg.mxu0
    %143 = vmatpush.bf16.msra.mxu0 0
    %144 = vmatpush.bf16.msra.mxu0 0
    %145 = vmatpush.bf16.msra.mxu0 0
    %146 = vmatpush.bf16.msra.mxu0 0
    %147 = vmatpush.bf16.msra.mxu0 0
    %148 = vmatpush.bf16.msra.mxu0 0
    %149 = vmatpush.bf16.msra.mxu0 0
    %150 = vmatpush.bf16.msra.mxu0 %v122
    %151 = vmatmul.bf16.gmra.mxu0 %v127
    %v152 = vpop.f32.mrf.mxu0
    %v153 = vadd.f32 %v112, %v152
    %v154 = vpop.f32.mrf.mxu0
    %v155 = vadd.f32 %v112, %v154
    %156 = vdwg.mxu0
    %v157 = vmax.f32 %v139, 0.0
    %v158 = vmax.f32 %v153, 0.0
    %v159 = vmax.f32 %v141, 0.0
    %v160 = vmax.f32 %v155, 0.0
    %v161 = vpack.c.bf16 %v159, %v157
    %v162 = vpack.c.bf16 %v160, %v158
    %v163 = vld [vmem:[#allocation8] sm:$0xff]
    %v164 = vld [vmem:[#allocation8 + $0x8] sm:$0xff]
    %v165 = vld [vmem:[#allocation8 + $0x10] sm:$0xff]
    %v166 = vld [vmem:[#allocation8 + $0x18] sm:$0xff]
    %v167 = vld [vmem:[#allocation8 + $0x20] sm:$0xff]
    %v168 = vld [vmem:[#allocation8 + $0x28] sm:$0xff]
    %v169 = vld [vmem:[#allocation8 + $0x30] sm:$0xff]
    %v170 = vld [vmem:[#allocation8 + $0x38] sm:$0xff]
    %v171 = vld [vmem:[#allocation8 + $0x40] sm:$0xff]
    %v172 = vld [vmem:[#allocation8 + $0x48] sm:$0xff]
    %v173 = vld [vmem:[#allocation8 + $0x50] sm:$0xff]
    %v174 = vld [vmem:[#allocation8 + $0x58] sm:$0xff]
    %v175 = vld [vmem:[#allocation8 + $0x60] sm:$0xff]
    %v176 = vld [vmem:[#allocation8 + $0x68] sm:$0xff]
    %v177 = vld [vmem:[#allocation8 + $0x70] sm:$0xff]
    %v178 = vld [vmem:[#allocation8 + $0x78] sm:$0xff]
    %v179 = vld [vmem:[#allocation8 + $0x80] sm:$0xff]
    %v180 = vld [vmem:[#allocation8 + $0x88] sm:$0xff]
    %v181 = vld [vmem:[#allocation8 + $0x90] sm:$0xff]
    %v182 = vld [vmem:[#allocation8 + $0x98] sm:$0xff]
    %v183 = vld [vmem:[#allocation8 + $0xa0] sm:$0xff]
    %v184 = vld [vmem:[#allocation8 + $0xa8] sm:$0xff]
    %v185 = vld [vmem:[#allocation8 + $0xb0] sm:$0xff]
    %v186 = vld [vmem:[#allocation8 + $0xb8] sm:$0xff]
    %v187 = vld [vmem:[#allocation8 + $0xc0] sm:$0xff]
    %v188 = vld [vmem:[#allocation8 + $0xc8] sm:$0xff]
    %v189 = vld [vmem:[#allocation8 + $0xd0] sm:$0xff]
    %v190 = vld [vmem:[#allocation8 + $0xd8] sm:$0xff]
    %v191 = vld [vmem:[#allocation8 + $0xe0] sm:$0xff]
    %v192 = vld [vmem:[#allocation8 + $0xe8] sm:$0xff]
    %v193 = vld [vmem:[#allocation8 + $0xf0] sm:$0xff]
    %v194 = vld [vmem:[#allocation8 + $0xf8] sm:$0xff]
    %v195 = vld [vmem:[%s4] sm:$0x3]
    %v197 = vperm.slane %v195, 0
    %v198 = vperm.slane %v195, 1
    %v233 = vunpack.c.l.b16 %v163
    %v234 = vunpack.c.h.b16 %v163
    %v235 = vunpack.c.l.b16 %v164
    %v236 = vunpack.c.h.b16 %v164
    %v237 = vunpack.c.l.b16 %v165
    %v238 = vunpack.c.h.b16 %v165
    %v239 = vunpack.c.l.b16 %v166
    %v240 = vunpack.c.h.b16 %v166
    %v241 = vunpack.c.l.b16 %v167
    %v242 = vunpack.c.h.b16 %v167
    %v243 = vunpack.c.l.b16 %v168
    %v244 = vunpack.c.h.b16 %v168
    %v245 = vunpack.c.l.b16 %v169
    %v246 = vunpack.c.h.b16 %v169
    %v247 = vunpack.c.l.b16 %v170
    %v248 = vunpack.c.h.b16 %v170
    %v249 = vunpack.c.l.b16 %v171
    %v250 = vunpack.c.h.b16 %v171
    %v251 = vunpack.c.l.b16 %v172
    %v252 = vunpack.c.h.b16 %v172
    %v253 = vunpack.c.l.b16 %v173
    %v254 = vunpack.c.h.b16 %v173
    %v255 = vunpack.c.l.b16 %v174
    %v256 = vunpack.c.h.b16 %v174
    %v257 = vunpack.c.l.b16 %v175
    %v258 = vunpack.c.h.b16 %v175
    %v259 = vunpack.c.l.b16 %v176
    %v260 = vunpack.c.h.b16 %v176
    %v261 = vunpack.c.l.b16 %v177
    %v262 = vunpack.c.h.b16 %v177
    %v263 = vunpack.c.l.b16 %v178
    %v264 = vunpack.c.h.b16 %v178
    %v265 = vunpack.c.l.b16 %v179
    %v266 = vunpack.c.h.b16 %v179
    %v267 = vunpack.c.l.b16 %v180
    %v268 = vunpack.c.h.b16 %v180
    %v269 = vunpack.c.l.b16 %v181
    %v270 = vunpack.c.h.b16 %v181
    %v271 = vunpack.c.l.b16 %v182
    %v272 = vunpack.c.h.b16 %v182
    %v273 = vunpack.c.l.b16 %v183
    %v274 = vunpack.c.h.b16 %v183
    %v275 = vunpack.c.l.b16 %v184
    %v276 = vunpack.c.h.b16 %v184
    %v277 = vunpack.c.l.b16 %v185
    %v278 = vunpack.c.h.b16 %v185
    %v279 = vunpack.c.l.b16 %v186
    %v280 = vunpack.c.h.b16 %v186
    %v281 = vunpack.c.l.b16 %v187
    %v282 = vunpack.c.h.b16 %v187
    %v283 = vunpack.c.l.b16 %v188
    %v284 = vunpack.c.h.b16 %v188
    %v285 = vunpack.c.l.b16 %v189
    %v286 = vunpack.c.h.b16 %v189
    %v287 = vunpack.c.l.b16 %v190
    %v288 = vunpack.c.h.b16 %v190
    %v289 = vunpack.c.l.b16 %v191
    %v290 = vunpack.c.h.b16 %v191
    %v291 = vunpack.c.l.b16 %v192
    %v292 = vunpack.c.h.b16 %v192
    %v293 = vunpack.c.l.b16 %v193
    %v294 = vunpack.c.h.b16 %v193
    %v295 = vunpack.c.l.b16 %v194
    %v296 = vunpack.c.h.b16 %v194
    %v297 = vpack.c.b16 %v235, %v233
    %v298 = vpack.c.b16 %v236, %v234
    %v299 = vpack.c.b16 %v239, %v237
    %v300 = vpack.c.b16 %v240, %v238
    %v301 = vpack.c.b16 %v243, %v241
    %v302 = vpack.c.b16 %v244, %v242
    %v303 = vpack.c.b16 %v247, %v245
    %v304 = vpack.c.b16 %v248, %v246
    %v305 = vpack.c.b16 %v251, %v249
    %v306 = vpack.c.b16 %v252, %v250
    %v307 = vpack.c.b16 %v255, %v253
    %v308 = vpack.c.b16 %v256, %v254
    %v309 = vpack.c.b16 %v259, %v257
    %v310 = vpack.c.b16 %v260, %v258
    %v311 = vpack.c.b16 %v263, %v261
    %v312 = vpack.c.b16 %v264, %v262
    %v313 = vpack.c.b16 %v267, %v265
    %v314 = vpack.c.b16 %v268, %v266
    %v315 = vpack.c.b16 %v271, %v269
    %v316 = vpack.c.b16 %v272, %v270
    %v317 = vpack.c.b16 %v275, %v273
    %v318 = vpack.c.b16 %v276, %v274
    %v319 = vpack.c.b16 %v279, %v277
    %v320 = vpack.c.b16 %v280, %v278
    %v321 = vpack.c.b16 %v283, %v281
    %v322 = vpack.c.b16 %v284, %v282
    %v323 = vpack.c.b16 %v287, %v285
    %v324 = vpack.c.b16 %v288, %v286
    %v325 = vpack.c.b16 %v291, %v289
    %v326 = vpack.c.b16 %v292, %v290
    %v327 = vpack.c.b16 %v295, %v293
    %v328 = vpack.c.b16 %v296, %v294
    %361 = vmatpush.bf16.msra.mxu0 %v311
    %362 = vmatpush.bf16.msra.mxu0 %v309
    %363 = vmatpush.bf16.msra.mxu0 %v307
    %364 = vmatpush.bf16.msra.mxu0 %v305
    %365 = vmatpush.bf16.msra.mxu0 %v303
    %366 = vmatpush.bf16.msra.mxu0 %v301
    %367 = vmatpush.bf16.msra.mxu0 %v299
    %368 = vmatpush.bf16.msra.mxu0 %v297
    %369 = vmatmul.bf16.gmra.mxu0 %v161
    %v370 = vpop.f32.mrf.mxu0
    %v371 = vadd.f32 %v197, %v370
    %v372 = vpop.f32.mrf.mxu0
    %v373 = vadd.f32 %v197, %v372
    %374 = vdwg.mxu0
    %375 = vmatpush.bf16.msra.mxu0 %v327
    %376 = vmatpush.bf16.msra.mxu0 %v325
    %377 = vmatpush.bf16.msra.mxu0 %v323
    %378 = vmatpush.bf16.msra.mxu0 %v321
    %379 = vmatpush.bf16.msra.mxu0 %v319
    %380 = vmatpush.bf16.msra.mxu0 %v317
    %381 = vmatpush.bf16.msra.mxu0 %v315
    %382 = vmatpush.bf16.msra.mxu0 %v313
    %383 = vmatmul.bf16.gmra.mxu0 %v162
    %v384 = vpop.f32.mrf.mxu0
    %v385 = vadd.f32 %v371, %v384
    %v386 = vpop.f32.mrf.mxu0
    %v387 = vadd.f32 %v373, %v386
    %388 = vdwg.mxu0
    %389 = vmatpush.bf16.msra.mxu0 %v312
    %390 = vmatpush.bf16.msra.mxu0 %v310
    %391 = vmatpush.bf16.msra.mxu0 %v308
    %392 = vmatpush.bf16.msra.mxu0 %v306
    %393 = vmatpush.bf16.msra.mxu0 %v304
    %394 = vmatpush.bf16.msra.mxu0 %v302
    %395 = vmatpush.bf16.msra.mxu0 %v300
    %396 = vmatpush.bf16.msra.mxu0 %v298
    %397 = vmatmul.bf16.gmra.mxu0 %v161
    %v398 = vpop.f32.mrf.mxu0
    %v399 = vadd.f32 %v198, %v398
    %v400 = vpop.f32.mrf.mxu0
    %v401 = vadd.f32 %v198, %v400
    %402 = vdwg.mxu0
    %403 = vmatpush.bf16.msra.mxu0 %v328
    %404 = vmatpush.bf16.msra.mxu0 %v326
    %405 = vmatpush.bf16.msra.mxu0 %v324
    %406 = vmatpush.bf16.msra.mxu0 %v322
    %407 = vmatpush.bf16.msra.mxu0 %v320
    %408 = vmatpush.bf16.msra.mxu0 %v318
    %409 = vmatpush.bf16.msra.mxu0 %v316
    %410 = vmatpush.bf16.msra.mxu0 %v314
    %411 = vmatmul.bf16.gmra.mxu0 %v162
    %v412 = vpop.f32.mrf.mxu0
    %v413 = vadd.f32 %v399, %v412
    %v414 = vpop.f32.mrf.mxu0
    %v415 = vadd.f32 %v401, %v414
    %416 = vdwg.mxu0
    %v417 = vmax.f32 %v385, 0.0
    %v418 = vmax.f32 %v413, 0.0
    %v419 = vmax.f32 %v387, 0.0
    %v420 = vmax.f32 %v415, 0.0
    %v421 = vpack.c.bf16 %v419, %v417
    %v422 = vpack.c.bf16 %v420, %v418
    %v423 = vld [vmem:[#allocation10] sm:$0xf]
    %v424 = vld [vmem:[#allocation10 + $0x4] sm:$0xf]
    %v425 = vld [vmem:[#allocation10 + $0x8] sm:$0xf]
    %v426 = vld [vmem:[#allocation10 + $0xc] sm:$0xf]
    %v427 = vld [vmem:[#allocation10 + $0x10] sm:$0xf]
    %v428 = vld [vmem:[#allocation10 + $0x14] sm:$0xf]
    %v429 = vld [vmem:[#allocation10 + $0x18] sm:$0xf]
    %v430 = vld [vmem:[#allocation10 + $0x1c] sm:$0xf]
    %v431 = vld [vmem:[#allocation10 + $0x20] sm:$0xf]
    %v432 = vld [vmem:[#allocation10 + $0x24] sm:$0xf]
    %v433 = vld [vmem:[#allocation10 + $0x28] sm:$0xf]
    %v434 = vld [vmem:[#allocation10 + $0x2c] sm:$0xf]
    %v435 = vld [vmem:[#allocation10 + $0x30] sm:$0xf]
    %v436 = vld [vmem:[#allocation10 + $0x34] sm:$0xf]
    %v437 = vld [vmem:[#allocation10 + $0x38] sm:$0xf]
    %v438 = vld [vmem:[#allocation10 + $0x3c] sm:$0xf]
    %v439 = vld [vmem:[#allocation10 + $0x40] sm:$0xf]
    %v440 = vld [vmem:[#allocation10 + $0x44] sm:$0xf]
    %v441 = vld [vmem:[#allocation10 + $0x48] sm:$0xf]
    %v442 = vld [vmem:[#allocation10 + $0x4c] sm:$0xf]
    %v443 = vld [vmem:[#allocation10 + $0x50] sm:$0xf]
    %v444 = vld [vmem:[#allocation10 + $0x54] sm:$0xf]
    %v445 = vld [vmem:[#allocation10 + $0x58] sm:$0xf]
    %v446 = vld [vmem:[#allocation10 + $0x5c] sm:$0xf]
    %v447 = vld [vmem:[#allocation10 + $0x60] sm:$0xf]
    %v448 = vld [vmem:[#allocation10 + $0x64] sm:$0xf]
    %v449 = vld [vmem:[#allocation10 + $0x68] sm:$0xf]
    %v450 = vld [vmem:[#allocation10 + $0x6c] sm:$0xf]
    %v451 = vld [vmem:[#allocation10 + $0x70] sm:$0xf]
    %v452 = vld [vmem:[#allocation10 + $0x74] sm:$0xf]
    %v453 = vld [vmem:[#allocation10 + $0x78] sm:$0xf]
    %v454 = vld [vmem:[#allocation10 + $0x7c] sm:$0xf]
    %v455 = vld [vmem:[%s6] sm:$0x1]
    %v457 = vperm.slane %v455, 0
    %v491 = vunpack.c.l.b16 %v423
    %v492 = vunpack.c.l.b16 %v424
    %v493 = vunpack.c.l.b16 %v425
    %v494 = vunpack.c.l.b16 %v426
    %v495 = vunpack.c.l.b16 %v427
    %v496 = vunpack.c.l.b16 %v428
    %v497 = vunpack.c.l.b16 %v429
    %v498 = vunpack.c.l.b16 %v430
    %v499 = vunpack.c.l.b16 %v431
    %v500 = vunpack.c.l.b16 %v432
    %v501 = vunpack.c.l.b16 %v433
    %v502 = vunpack.c.l.b16 %v434
    %v503 = vunpack.c.l.b16 %v435
    %v504 = vunpack.c.l.b16 %v436
    %v505 = vunpack.c.l.b16 %v437
    %v506 = vunpack.c.l.b16 %v438
    %v507 = vunpack.c.l.b16 %v439
    %v508 = vunpack.c.l.b16 %v440
    %v509 = vunpack.c.l.b16 %v441
    %v510 = vunpack.c.l.b16 %v442
    %v511 = vunpack.c.l.b16 %v443
    %v512 = vunpack.c.l.b16 %v444
    %v513 = vunpack.c.l.b16 %v445
    %v514 = vunpack.c.l.b16 %v446
    %v515 = vunpack.c.l.b16 %v447
    %v516 = vunpack.c.l.b16 %v448
    %v517 = vunpack.c.l.b16 %v449
    %v518 = vunpack.c.l.b16 %v450
    %v519 = vunpack.c.l.b16 %v451
    %v520 = vunpack.c.l.b16 %v452
    %v521 = vunpack.c.l.b16 %v453
    %v522 = vunpack.c.l.b16 %v454
    %v523 = vpack.c.b16 %v492, %v491
    %v524 = vpack.c.b16 %v494, %v493
    %v525 = vpack.c.b16 %v496, %v495
    %v526 = vpack.c.b16 %v498, %v497
    %v527 = vpack.c.b16 %v500, %v499
    %v528 = vpack.c.b16 %v502, %v501
    %v529 = vpack.c.b16 %v504, %v503
    %v530 = vpack.c.b16 %v506, %v505
    %v531 = vpack.c.b16 %v508, %v507
    %v532 = vpack.c.b16 %v510, %v509
    %v533 = vpack.c.b16 %v512, %v511
    %v534 = vpack.c.b16 %v514, %v513
    %v535 = vpack.c.b16 %v516, %v515
    %v536 = vpack.c.b16 %v518, %v517
    %v537 = vpack.c.b16 %v520, %v519
    %v538 = vpack.c.b16 %v522, %v521
    %555 = vmatpush.bf16.msra.mxu0 %v530
    %556 = vmatpush.bf16.msra.mxu0 %v529
    %557 = vmatpush.bf16.msra.mxu0 %v528
    %558 = vmatpush.bf16.msra.mxu0 %v527
    %559 = vmatpush.bf16.msra.mxu0 %v526
    %560 = vmatpush.bf16.msra.mxu0 %v525
    %561 = vmatpush.bf16.msra.mxu0 %v524
    %562 = vmatpush.bf16.msra.mxu0 %v523
    %563 = vmatmul.bf16.gmra.mxu0 %v421
    %v564 = vpop.f32.mrf.mxu0
    %v565 = vadd.f32 %v457, %v564
    %v566 = vpop.f32.mrf.mxu0
    %v567 = vadd.f32 %v457, %v566
    %568 = vdwg.mxu0
    %569 = vmatpush.bf16.msra.mxu0 %v538
    %570 = vmatpush.bf16.msra.mxu0 %v537
    %571 = vmatpush.bf16.msra.mxu0 %v536
    %572 = vmatpush.bf16.msra.mxu0 %v535
    %573 = vmatpush.bf16.msra.mxu0 %v534
    %574 = vmatpush.bf16.msra.mxu0 %v533
    %575 = vmatpush.bf16.msra.mxu0 %v532
    %576 = vmatpush.bf16.msra.mxu0 %v531
    %577 = vmatmul.bf16.gmra.mxu0 %v422
    %v578 = vpop.f32.mrf.mxu0
    %v579 = vadd.f32 %v565, %v578
    %v580 = vpop.f32.mrf.mxu0
    %v581 = vadd.f32 %v567, %v580
    %582 = vdwg.mxu0
    %v583 = vtanh.pop %v579
    %v584 = vtanh.pop %v581
    %v585 = vpack.c.bf16 %v583, %v583
    %v586 = vpack.c.bf16 %v584, %v584
    %587 = vst [vmem:[#allocation11] sm:$0xf] %v585
    %588 = vst [vmem:[#allocation11 + $0x4] sm:$0xf] %v586
    // Predicated region
    $region50: #{tpu_custom_call.1} parent=1 // pred_check
      _
    $region51: #{tpu_custom_call.1} parent=1 // pred_check_branch
      %590 = sbr.rel (0) target = $region53
    $region52: #{tpu_custom_call.1} parent=1 // pred_region
      %592 = vsyncadd [#allocation4], 0
      %s593 = sshll.u32 [#allocation11], 4
      %s594 = int_to_ptr.vmem [resolvable:$true] %s593
      %s595 = sshll.u32 %s7, 4
      %s596 = int_to_ptr.hbm [resolvable:$true] %s595
      %601 = dma.vmem_to_hbm [thread:$0]  %s594, 128, %s596, [#allocation4], 64, 64, 4
    $region53: #{tpu_custom_call.1} parent=1 // pred_fallthru
      _
    // Predicated region
    $region54: #{tpu_custom_call.1} parent=1 // pred_check
      _
    $region55: #{tpu_custom_call.1} parent=1 // pred_check_branch
      %603 = sbr.rel (0) target = $region57
    $region56: #{tpu_custom_call.1} parent=1 // pred_region
      %605 = dma.done [#allocation4], 128
    $region57: #{tpu_custom_call.1} parent=1 // pred_fallthru
      _
    %606 = vsyncpa [#allocation3], 1
    %607 = vsyncpa [#allocation6], 1
    %608 = vsyncpa [#allocation9], 1
    %609 = vsyncpa [#allocation4], 1

</llo_original>
